<compile_context>
chip_gen: v6e
topology: v6e:2x2x1
jax: 0.10.0
libtpu: 0.0.40
codegen_flags: <defaults>
</compile_context>

<pallas_src>
import functools

import jax
import jax.numpy as jnp
from jax.experimental import pallas as pl
from jax.experimental.pallas import tpu as pltpu


def _cfg_kernel(cond_scale, sigma_ref, x_ref, uncond_ref, cond_ref,
                wbd_ref, prep_ref, wcr_ref, out_ref):
    """One grid step = one batch block, fully batched (no per-sample loop).

    cond_scale : python float, closed over at trace time
    sigma_ref  : VMEM (bb*C, 1)     per-row sigma column (sigma repeated C times)
    x_ref      : VMEM (bb*C, HWp)   latent rows, lane-dense over padded H*W
    uncond_ref : VMEM (bb*S, D)     unconditional context, natural layout
    cond_ref   : VMEM (bb*S, D)     conditional context, natural layout
    wbd_ref    : VMEM (bb*C, bb*C)  block-diagonal channel-mix weight kron(I_bb, w1^T)
    prep_ref   : VMEM (bb*C, bb*S)  pooling+replication matrix kron(I_bb, ones(C,S)/S)
    wcr_ref    : VMEM (bb*C, D)     row-tiled context projection tile(wc^T, (bb,1))
    out_ref    : VMEM (bb*C, HWp)   aliased with x
    """
    x = x_ref[...]                                                # (rows, HWp)

    # Channel mix for the entire block: ONE matmul against the block-diagonal
    # weight (shared part of both CFG halves, computed once).
    h = jnp.dot(wbd_ref[...], x, preferred_element_type=jnp.float32)

    # Pooled contexts for all samples at once, already replicated onto each
    # sample's C output rows: one tiny matmul per context (mean over S and the
    # per-sample segmentation are folded into `prep`).
    pool_u = jnp.dot(prep_ref[...], uncond_ref[...],
                     preferred_element_type=jnp.float32)          # (rows, D)
    pool_c = jnp.dot(prep_ref[...], cond_ref[...],
                     preferred_element_type=jnp.float32)          # (rows, D)

    # CFG combine folded onto the tiny pooled-context tile.  Exact because the
    # synthetic inner model is affine in the pooled context:
    #   eps_u + s*(eps_c - eps_u) == x + sigma*(h + proj(pool_u + s*(pool_c - pool_u)))
    pool_cfg = pool_u + cond_scale * (pool_c - pool_u)            # (rows, D)

    # Per-row context projection: lane reduction against the row-tiled wc^T.
    proj_col = jnp.sum(pool_cfg * wcr_ref[...], axis=1, keepdims=True)  # (rows, 1)

    # Single lane-dense elementwise combine; every store is a full-width vst.
    out_ref[...] = x + sigma_ref[...] * (h + proj_col)


def cfg_denoiser(x_nchw, sigma, uncond, cond, cond_scale, w1, wc,
                 *, batch_block=None):
    """Pallas-backed CFGDenoiser.forward.  x_nchw: (B, C, H, W) float32.

    cond_scale must be a static python scalar (it is baked into the kernel).
    """
    B, C, H, W = x_nchw.shape
    _, S, D = uncond.shape
    HW = H * W

    # Collapsed grid by default.  Lower batch_block to shard the batch (e.g.
    # B // 2 across the two v7x TensorCores) or to bound per-block VMEM when
    # B*C*HW grows (v5e: 16 MiB scoped default; v6e/v7x: 32 MiB; v7x has only
    # 64 MiB physical VMEM).
    if batch_block is None:
        batch_block = B
    assert B % batch_block == 0
    bb = batch_block
    num_blocks = B // bb
    rows = bb * C
    # (8,128) rule for the sub-blocked row axis.
    assert bb == B or rows % 8 == 0, "batch_block*C must be a multiple of 8"

    # Lane-density guard: pad H*W up to a multiple of 128 (no-op for 16x16).
    hw_pad = max(128, ((HW + 127) // 128) * 128)

    f32 = jnp.float32
    # Free, contiguous reshapes (no NCHW<->NHWC transposes anywhere).
    x2 = x_nchw.astype(f32).reshape(B * C, HW)
    if hw_pad != HW:
        x2 = jnp.pad(x2, ((0, 0), (0, hw_pad - HW)))
    u2 = uncond.astype(f32).reshape(B * S, D)
    c2 = cond.astype(f32).reshape(B * S, D)

    # Tiny precomputed operands (built once in the wrapper).
    sigma_col = jnp.repeat(sigma.astype(f32), C).reshape(B * C, 1)     # (B*C, 1)
    eye_bb = jnp.eye(bb, dtype=f32)
    wbd = jnp.kron(eye_bb, jnp.transpose(w1).astype(f32))               # (rows, rows)
    prep = jnp.kron(eye_bb, jnp.full((C, S), 1.0 / S, dtype=f32))       # (rows, bb*S)
    wcr = jnp.tile(jnp.transpose(wc).astype(f32), (bb, 1))              # (rows, D)

    kernel = functools.partial(_cfg_kernel, float(cond_scale))

    out2 = pl.pallas_call(
        kernel,
        out_shape=jax.ShapeDtypeStruct((B * C, hw_pad), f32),
        grid=(num_blocks,),
        in_specs=[
            pl.BlockSpec((rows, 1), lambda i: (i, 0)),           # sigma column
            pl.BlockSpec((rows, hw_pad), lambda i: (i, 0)),      # x rows (lane-dense)
            pl.BlockSpec((bb * S, D), lambda i: (i, 0)),         # uncond (natural layout)
            pl.BlockSpec((bb * S, D), lambda i: (i, 0)),         # cond   (natural layout)
            pl.BlockSpec((rows, rows), lambda i: (0, 0)),        # kron(I, w1^T)  (resident)
            pl.BlockSpec((rows, bb * S), lambda i: (0, 0)),      # pooling matrix (resident)
            pl.BlockSpec((rows, D), lambda i: (0, 0)),           # tiled wc^T     (resident)
        ],
        out_specs=pl.BlockSpec((rows, hw_pad), lambda i: (i, 0)),
        input_output_aliases={1: 0},   # out = x + correction -> write in place of x
        compiler_params=pltpu.CompilerParams(
            dimension_semantics=("parallel",)),
    )(sigma_col, x2, u2, c2, wbd, prep, wcr)

    if hw_pad != HW:
        out2 = out2[:, :HW]
    return out2.reshape(B, C, H, W)


# ----------------------- pure-JAX reference (mirrors PyTorch control flow) ---
def _inner_model_ref(x_in, sigma_in, cond_in, w1, wc):
    B2, C, H, W = x_in.shape
    xf = jnp.transpose(x_in, (0, 2, 3, 1)).reshape(B2, H * W, C)
    h = xf @ w1
    proj = jnp.mean(cond_in, axis=1) @ wc                  # (2B, C)
    eps = xf + sigma_in[:, None, None] * (h + proj[:, None, :])
    return jnp.transpose(eps.reshape(B2, H, W, C), (0, 3, 1, 2))


def _cfg_ref(x, sigma, uncond, cond, cond_scale, w1, wc):
    x_in = jnp.concatenate([x] * 2)
    sigma_in = jnp.concatenate([sigma] * 2)
    cond_in = jnp.concatenate([uncond, cond])
    out = _inner_model_ref(x_in, sigma_in, cond_in, w1, wc)
    u, c = out[: x.shape[0]], out[x.shape[0]:]
    return u + (c - u) * cond_scale


if __name__ == "__main__":
    B, C, H, W = 2, 4, 16, 16      # SD-style latent: 4 channels
    S, D = 8, 32                   # context: seq=8, ctx_dim=32
    cond_scale = 7.5

    key = jax.random.PRNGKey(0)
    kx, ks, ku, kc, kw1, kwc = jax.random.split(key, 6)

    x = jax.random.normal(kx, (B, C, H, W), dtype=jnp.float32)
    sigma = jax.random.uniform(ks, (B,), dtype=jnp.float32, minval=0.1, maxval=2.0)
    uncond = jax.random.normal(ku, (B, S, D), dtype=jnp.float32)
    cond = jax.random.normal(kc, (B, S, D), dtype=jnp.float32)

    # deterministic synthetic inner-model parameters
    w1 = jax.random.normal(kw1, (C, C), dtype=jnp.float32) * 0.1
    wc = jax.random.normal(kwc, (D, C), dtype=jnp.float32) * 0.1

    out = jax.block_until_ready(
        cfg_denoiser(x, sigma, uncond, cond, cond_scale, w1, wc))
    ref = _cfg_ref(x, sigma, uncond, cond, cond_scale, w1, wc)

    assert out.shape == (B, C, H, W)
    assert jnp.allclose(out, ref, atol=1e-4, rtol=1e-4)
    print("KERNEL_OK")
</pallas_src>

<mosaic_0001>
module attributes {stable_mosaic.version = 11 : i64} {
  func.func @_cfg_kernel(%arg0: i32, %arg1: memref<8x1xf32, #tpu.memory_space<vmem>>, %arg2: memref<8x256xf32, #tpu.memory_space<vmem>>, %arg3: memref<16x32xf32, #tpu.memory_space<vmem>>, %arg4: memref<16x32xf32, #tpu.memory_space<vmem>>, %arg5: memref<8x8xf32, #tpu.memory_space<vmem>>, %arg6: memref<8x16xf32, #tpu.memory_space<vmem>>, %arg7: memref<8x32xf32, #tpu.memory_space<vmem>>, %arg8: memref<8x256xf32, #tpu.memory_space<vmem>>) attributes {dimension_semantics = [#tpu.dimension_semantics<parallel>], iteration_bounds = array<i64: 1>, scalar_prefetch = 0 : i64, scratch_operands = 0 : i64, tpu.core_type = #tpu.core_type<tc>, window_params = [{transform_indices = @transform_0, window_bounds = array<i64: 8, 1>}, {transform_indices = @transform_1, window_bounds = array<i64: 8, 256>}, {transform_indices = @transform_2, window_bounds = array<i64: 16, 32>}, {transform_indices = @transform_3, window_bounds = array<i64: 16, 32>}, {pipeline_mode = #tpu.pipeline_mode<synchronous>, transform_indices = @transform_4, window_bounds = array<i64: 8, 8>}, {pipeline_mode = #tpu.pipeline_mode<synchronous>, transform_indices = @transform_5, window_bounds = array<i64: 8, 16>}, {pipeline_mode = #tpu.pipeline_mode<synchronous>, transform_indices = @transform_6, window_bounds = array<i64: 8, 32>}, {transform_indices = @transform_7, window_bounds = array<i64: 8, 256>}]} {
    %c0 = arith.constant 0 : index
    %c0_0 = arith.constant 0 : index
    %0 = vector.load %arg2[%c0, %c0_0] : memref<8x256xf32, #tpu.memory_space<vmem>>, vector<8x256xf32>
    %c0_1 = arith.constant 0 : index
    %c0_2 = arith.constant 0 : index
    %1 = vector.load %arg5[%c0_1, %c0_2] : memref<8x8xf32, #tpu.memory_space<vmem>>, vector<8x8xf32>
    %cst = arith.constant dense<0.000000e+00> : vector<8x256xf32>
    %2 = tpu.matmul %1, %0, %cst {dimension_numbers = #tpu.dot_dimension_numbers<[1], [0], [0], [1], [0, 0, 1, 1], [], []>} : vector<8x8xf32>, vector<8x256xf32>, vector<8x256xf32> -> vector<8x256xf32>
    %c0_3 = arith.constant 0 : index
    %c0_4 = arith.constant 0 : index
    %3 = vector.load %arg6[%c0_3, %c0_4] : memref<8x16xf32, #tpu.memory_space<vmem>>, vector<8x16xf32>
    %c0_5 = arith.constant 0 : index
    %c0_6 = arith.constant 0 : index
    %4 = vector.load %arg3[%c0_5, %c0_6] : memref<16x32xf32, #tpu.memory_space<vmem>>, vector<16x32xf32>
    %cst_7 = arith.constant dense<0.000000e+00> : vector<8x32xf32>
    %5 = tpu.matmul %3, %4, %cst_7 {dimension_numbers = #tpu.dot_dimension_numbers<[1], [0], [0], [1], [0, 0, 1, 1], [], []>} : vector<8x16xf32>, vector<16x32xf32>, vector<8x32xf32> -> vector<8x32xf32>
    %c0_8 = arith.constant 0 : index
    %c0_9 = arith.constant 0 : index
    %6 = vector.load %arg6[%c0_8, %c0_9] : memref<8x16xf32, #tpu.memory_space<vmem>>, vector<8x16xf32>
    %c0_10 = arith.constant 0 : index
    %c0_11 = arith.constant 0 : index
    %7 = vector.load %arg4[%c0_10, %c0_11] : memref<16x32xf32, #tpu.memory_space<vmem>>, vector<16x32xf32>
    %cst_12 = arith.constant dense<0.000000e+00> : vector<8x32xf32>
    %8 = tpu.matmul %6, %7, %cst_12 {dimension_numbers = #tpu.dot_dimension_numbers<[1], [0], [0], [1], [0, 0, 1, 1], [], []>} : vector<8x16xf32>, vector<16x32xf32>, vector<8x32xf32> -> vector<8x32xf32>
    %9 = arith.subf %8, %5 : vector<8x32xf32>
    %cst_13 = arith.constant 7.500000e+00 : f32
    %10 = vector.broadcast %cst_13 : f32 to vector<8x32xf32>
    %11 = arith.mulf %10, %9 : vector<8x32xf32>
    %12 = arith.addf %5, %11 : vector<8x32xf32>
    %c0_14 = arith.constant 0 : index
    %c0_15 = arith.constant 0 : index
    %13 = vector.load %arg7[%c0_14, %c0_15] : memref<8x32xf32, #tpu.memory_space<vmem>>, vector<8x32xf32>
    %14 = arith.mulf %12, %13 : vector<8x32xf32>
    %cst_16 = arith.constant dense<0.000000e+00> : vector<8xf32>
    %15 = vector.multi_reduction <add>, %14, %cst_16 [1] : vector<8x32xf32> to vector<8xf32>
    %16 = vector.shape_cast %15 : vector<8xf32> to vector<8x1xf32>
    %c0_17 = arith.constant 0 : index
    %c0_18 = arith.constant 0 : index
    %17 = vector.load %arg1[%c0_17, %c0_18] : memref<8x1xf32, #tpu.memory_space<vmem>>, vector<8x1xf32>
    %18 = vector.broadcast %16 : vector<8x1xf32> to vector<8x256xf32>
    %19 = arith.addf %2, %18 : vector<8x256xf32>
    %20 = vector.broadcast %17 : vector<8x1xf32> to vector<8x256xf32>
    %21 = arith.mulf %20, %19 : vector<8x256xf32>
    %22 = arith.addf %0, %21 : vector<8x256xf32>
    %c0_19 = arith.constant 0 : index
    %c0_20 = arith.constant 0 : index
    %23 = vector.load %arg8[%c0_19, %c0_20] : memref<8x256xf32, #tpu.memory_space<vmem>>, vector<8x256xf32>
    tpu.vector_store %arg8[%c0_19, %c0_20], %22 {strides = array<i32>} : memref<8x256xf32, #tpu.memory_space<vmem>>, vector<8x256xf32>,
    return
  }
  func.func @transform_0(%arg0: i32) -> (i32, i32) {
    %c0_i32 = arith.constant 0 : i32
    %c0_i32_0 = arith.constant 0 : i32
    return %arg0, %c0_i32 : i32, i32
  }
  func.func @transform_1(%arg0: i32) -> (i32, i32) {
    %c0_i32 = arith.constant 0 : i32
    %c0_i32_0 = arith.constant 0 : i32
    return %arg0, %c0_i32 : i32, i32
  }
  func.func @transform_2(%arg0: i32) -> (i32, i32) {
    %c0_i32 = arith.constant 0 : i32
    %c0_i32_0 = arith.constant 0 : i32
    return %arg0, %c0_i32 : i32, i32
  }
  func.func @transform_3(%arg0: i32) -> (i32, i32) {
    %c0_i32 = arith.constant 0 : i32
    %c0_i32_0 = arith.constant 0 : i32
    return %arg0, %c0_i32 : i32, i32
  }
  func.func @transform_4(%arg0: i32) -> (i32, i32) {
    %c0_i32 = arith.constant 0 : i32
    %c0_i32_0 = arith.constant 0 : i32
    %c0_i32_1 = arith.constant 0 : i32
    return %c0_i32, %c0_i32_0 : i32, i32
  }
  func.func @transform_5(%arg0: i32) -> (i32, i32) {
    %c0_i32 = arith.constant 0 : i32
    %c0_i32_0 = arith.constant 0 : i32
    %c0_i32_1 = arith.constant 0 : i32
    return %c0_i32, %c0_i32_0 : i32, i32
  }
  func.func @transform_6(%arg0: i32) -> (i32, i32) {
    %c0_i32 = arith.constant 0 : i32
    %c0_i32_0 = arith.constant 0 : i32
    %c0_i32_1 = arith.constant 0 : i32
    return %c0_i32, %c0_i32_0 : i32, i32
  }
  func.func @transform_7(%arg0: i32) -> (i32, i32) {
    %c0_i32 = arith.constant 0 : i32
    %c0_i32_0 = arith.constant 0 : i32
    return %arg0, %c0_i32 : i32, i32
  }
}

</mosaic_0001>

<llo_original>
// kernel: tpu_custom_call.1
$region0: #{tpu_custom_call.1}
  #allocation0 [shape = 'u32[]', space=smem, size = 0x4, offset = 0x4, fixed_abs, tag = 'smem constant byte address 0x4 - core index']
  #allocation1 [shape = 'u32[144,128]{1,0:T(1,128)}', space=vmem, size = 0x12000, scoped, tag = 'internal scratch']
  %s0 = inlined_call_operand.vmem [shape: f32[8,1], index: 0, kind: input, shape index: {}]
  %s1 = inlined_call_operand.hbm [shape: f32[8,256], index: 1, kind: input, shape index: {}, may-alias: {1,7}]
  %s2 = inlined_call_operand.vmem [shape: f32[16,32], index: 2, kind: input, shape index: {}]
  %s3 = inlined_call_operand.vmem [shape: f32[16,32], index: 3, kind: input, shape index: {}]
  %s4 = inlined_call_operand.vmem [shape: f32[8,8], index: 4, kind: input, shape index: {}]
  %s5 = inlined_call_operand.hbm [shape: f32[8,16], index: 5, kind: input, shape index: {}]
  %s6 = inlined_call_operand.hbm [shape: f32[8,32], index: 6, kind: input, shape index: {}]
  %s7 = inlined_call_operand.hbm [shape: f32[8,256], index: 7, kind: output, shape index: {}, may-alias: {1,7}]
  %s8 = sld [smem:[#allocation0]]
  $region50: #{tpu_custom_call.1} parent=0
    _
  %s10 = ssub.s32 1, %s8
  %s11 = scalar_select 0, %s10, %s8
  $region1: #{tpu_custom_call.1} parent=0
    #allocation2 [shape = 'u8[8192]{0}', space=vmem, size = 0x2000, scoped, tag = 'input window, operand 1, single buffered']
    #allocation3 [shape = 's32[1]{0}', space=sflag, size = 0x4, scoped, tag = 'scoped memory for tpu_custom_call.1']
    #allocation4 [shape = 's32[1]{0}', space=sflag, size = 0x4, scoped, tag = 'scoped memory for tpu_custom_call.1']
    #allocation5 [shape = 'u8[4096]{0}', space=vmem, size = 0x1000, scoped, tag = 'input window, operand 5, single buffered']
    #allocation6 [shape = 's32[1]{0}', space=sflag, size = 0x4, scoped, tag = 'scoped memory for tpu_custom_call.1']
    #allocation7 [shape = 'u8[4096]{0}', space=vmem, size = 0x1000, scoped, tag = 'input window, operand 6, single buffered']
    #allocation8 [shape = 'u8[8192]{0}', space=vmem, size = 0x2000, scoped, tag = 'output window, operand 0, single buffered']
    %12 = vsyncpa [#allocation3], 0
    %13 = vsyncpa [#allocation6], 0
    %14 = vsyncpa [#allocation4], 0
    // Predicated region
    $region2: #{tpu_custom_call.1} parent=1 // pred_check
      _
    $region3: #{tpu_custom_call.1} parent=1 // pred_check_branch
      %16 = sbr.rel (0) target = $region5
    $region4: #{tpu_custom_call.1} parent=1 // pred_region
      _
    $region5: #{tpu_custom_call.1} parent=1 // pred_fallthru
      _
    // Predicated region
    $region6: #{tpu_custom_call.1} parent=1 // pred_check
      _
    $region7: #{tpu_custom_call.1} parent=1 // pred_check_branch
      %18 = sbr.rel (0) target = $region9
    $region8: #{tpu_custom_call.1} parent=1 // pred_region
      %s20 = ssub.s32 256, 256
      %21 = vsyncadd [#allocation3], %s20
      %s23 = sshll.u32 [#allocation2], 4
      %s24 = int_to_ptr.vmem [resolvable:$true] %s23
      %26 = dma.hbm_to_vmem [thread:$0]  %s1, 256, %s24, [#allocation3]
    $region9: #{tpu_custom_call.1} parent=1 // pred_fallthru
      _
    // Predicated region
    $region10: #{tpu_custom_call.1} parent=1 // pred_check
      _
    $region11: #{tpu_custom_call.1} parent=1 // pred_check_branch
      %28 = sbr.rel (0) target = $region13
    $region12: #{tpu_custom_call.1} parent=1 // pred_region
      _
    $region13: #{tpu_custom_call.1} parent=1 // pred_fallthru
      _
    // Predicated region
    $region14: #{tpu_custom_call.1} parent=1 // pred_check
      _
    $region15: #{tpu_custom_call.1} parent=1 // pred_check_branch
      %30 = sbr.rel (0) target = $region17
    $region16: #{tpu_custom_call.1} parent=1 // pred_region
      _
    $region17: #{tpu_custom_call.1} parent=1 // pred_fallthru
      _
    // Predicated region
    $region18: #{tpu_custom_call.1} parent=1 // pred_check
      _
    $region19: #{tpu_custom_call.1} parent=1 // pred_check_branch
      %32 = sbr.rel (0) target = $region21
    $region20: #{tpu_custom_call.1} parent=1 // pred_region
      _
    $region21: #{tpu_custom_call.1} parent=1 // pred_fallthru
      _
    // Predicated region
    $region22: #{tpu_custom_call.1} parent=1 // pred_check
      _
    $region23: #{tpu_custom_call.1} parent=1 // pred_check_branch
      %34 = sbr.rel (0) target = $region25
    $region24: #{tpu_custom_call.1} parent=1 // pred_region
      %s36 = ssub.s32 128, 128
      %37 = vsyncadd [#allocation6], %s36
      %s39 = sshll.u32 [#allocation5], 4
      %s40 = int_to_ptr.vmem [resolvable:$true] %s39
      %42 = dma.hbm_to_vmem [thread:$0]  %s5, 128, %s40, [#allocation6]
    $region25: #{tpu_custom_call.1} parent=1 // pred_fallthru
      _
    // Predicated region
    $region26: #{tpu_custom_call.1} parent=1 // pred_check
      _
    $region27: #{tpu_custom_call.1} parent=1 // pred_check_branch
      %44 = sbr.rel (0) target = $region29
    $region28: #{tpu_custom_call.1} parent=1 // pred_region
      %s46 = ssub.s32 128, 128
      %47 = vsyncadd [#allocation6], %s46
      %s49 = sshll.u32 [#allocation7], 4
      %s50 = int_to_ptr.vmem [resolvable:$true] %s49
      %52 = dma.hbm_to_vmem [thread:$0]  %s6, 128, %s50, [#allocation6]
    $region29: #{tpu_custom_call.1} parent=1 // pred_fallthru
      _
    // Predicated region
    $region30: #{tpu_custom_call.1} parent=1 // pred_check
      _
    $region31: #{tpu_custom_call.1} parent=1 // pred_check_branch
      %54 = sbr.rel (0) target = $region33
    $region32: #{tpu_custom_call.1} parent=1 // pred_region
      %55 = dma.done [#allocation3], 256
    $region33: #{tpu_custom_call.1} parent=1 // pred_fallthru
      _
    // Predicated region
    $region34: #{tpu_custom_call.1} parent=1 // pred_check
      _
    $region35: #{tpu_custom_call.1} parent=1 // pred_check_branch
      %57 = sbr.rel (0) target = $region37
    $region36: #{tpu_custom_call.1} parent=1 // pred_region
      %58 = dma.done [#allocation6], 128
    $region37: #{tpu_custom_call.1} parent=1 // pred_fallthru
      _
    // Predicated region
    $region38: #{tpu_custom_call.1} parent=1 // pred_check
      _
    $region39: #{tpu_custom_call.1} parent=1 // pred_check_branch
      %60 = sbr.rel (0) target = $region41
    $region40: #{tpu_custom_call.1} parent=1 // pred_region
      %61 = dma.done [#allocation6], 128
    $region41: #{tpu_custom_call.1} parent=1 // pred_fallthru
      _
    %v62 = vld [vmem:[#allocation2] sm:$0xff]
    %v63 = vld [vmem:[#allocation2 + $0x8] sm:$0xff]
    %v64 = vld [vmem:[%s4] sm:$0xff]
    %v65 = vld [vmem:[#allocation5] sm:$0xff]
    %v66 = vld [vmem:[%s2] sm:$0xff]
    %v67 = vld [vmem:[%s2 + $0x8] sm:$0xff]
    %vm68 = vcmask 130048
    %v70 = vsel %vm68, %v65, 0
    %72 = vmatprep.subr.mxu0 0.0
    %73 = vmatpush1.msra.mxu0 0.0
    %74 = vmatprep.subr.mxu0 0.0
    %75 = vmatpush1.msra.mxu0 0.0
    %76 = vmatprep.subr.mxu0 0.0
    %77 = vmatpush1.msra.mxu0 0.0
    %78 = vmatprep.subr.mxu0 0.0
    %79 = vmatpush1.msra.mxu0 0.0
    %80 = vmatprep.subr.mxu0 0.0
    %81 = vmatpush1.msra.mxu0 0.0
    %82 = vmatprep.subr.mxu0 0.0
    %83 = vmatpush1.msra.mxu0 0.0
    %84 = vmatprep.subr.mxu0 0.0
    %85 = vmatpush1.msra.mxu0 0.0
    %86 = vmatprep.subr.mxu0 0.0
    %87 = vmatpush1.msra.mxu0 0.0
    %88 = vmatprep.subr.mxu0 0.0
    %89 = vmatpush1.msra.mxu0 0.0
    %90 = vmatprep.subr.mxu0 0.0
    %91 = vmatpush1.msra.mxu0 0.0
    %92 = vmatprep.subr.mxu0 0.0
    %93 = vmatpush1.msra.mxu0 0.0
    %94 = vmatprep.subr.mxu0 0.0
    %95 = vmatpush1.msra.mxu0 0.0
    %96 = vmatprep.subr.mxu0 0.0
    %97 = vmatpush1.msra.mxu0 0.0
    %98 = vmatprep.subr.mxu0 0.0
    %99 = vmatpush1.msra.mxu0 0.0
    %100 = vmatprep.subr.mxu0 0.0
    %101 = vmatpush1.msra.mxu0 %v67
    %102 = vmatprep.subr.mxu0 0.0
    %103 = vmatpush1.msra.mxu0 %v66
    %104 = vmatprep.subr.mxu0 0.0
    %105 = vmatpush2.msra.mxu0 0.0
    %106 = vmatprep.subr.mxu0 0.0
    %107 = vmatpush2.msra.mxu0 0.0
    %108 = vmatprep.subr.mxu0 0.0
    %109 = vmatpush2.msra.mxu0 0.0
    %110 = vmatprep.subr.mxu0 0.0
    %111 = vmatpush2.msra.mxu0 0.0
    %112 = vmatprep.subr.mxu0 0.0
    %113 = vmatpush2.msra.mxu0 0.0
    %114 = vmatprep.subr.mxu0 0.0
    %115 = vmatpush2.msra.mxu0 0.0
    %116 = vmatprep.subr.mxu0 0.0
    %117 = vmatpush2.msra.mxu0 0.0
    %118 = vmatprep.subr.mxu0 0.0
    %119 = vmatpush2.msra.mxu0 0.0
    %120 = vmatprep.subr.mxu0 0.0
    %121 = vmatpush2.msra.mxu0 0.0
    %122 = vmatprep.subr.mxu0 0.0
    %123 = vmatpush2.msra.mxu0 0.0
    %124 = vmatprep.subr.mxu0 0.0
    %125 = vmatpush2.msra.mxu0 0.0
    %126 = vmatprep.subr.mxu0 0.0
    %127 = vmatpush2.msra.mxu0 0.0
    %128 = vmatprep.subr.mxu0 0.0
    %129 = vmatpush2.msra.mxu0 0.0
    %130 = vmatprep.subr.mxu0 0.0
    %131 = vmatpush2.msra.mxu0 0.0
    %132 = vmatprep.subr.mxu0 0.0
    %133 = vmatpush2.msra.mxu0 0.0
    %134 = vmatprep.subr.mxu0 0.0
    %135 = vmatpush2.msra.mxu0 0.0
    %136 = vmatprep.mubr.f32.mxu0 0.0
    %137 = vmatmul.mubr.f32.gmra.mxu0 %v70
    %v138 = vpop.f32.mrf.mxu0
    %v139 = vadd.f32 0.0, %v138
    %v140 = vpop.f32.mrf.mxu0
    %141 = vdwg.mxu0
    %v142 = vld [vmem:[%s3] sm:$0xff]
    %v143 = vld [vmem:[%s3 + $0x8] sm:$0xff]
    %144 = vmatprep.subr.mxu0 0.0
    %145 = vmatpush1.msra.mxu0 0.0
    %146 = vmatprep.subr.mxu0 0.0
    %147 = vmatpush1.msra.mxu0 0.0
    %148 = vmatprep.subr.mxu0 0.0
    %149 = vmatpush1.msra.mxu0 0.0
    %150 = vmatprep.subr.mxu0 0.0
    %151 = vmatpush1.msra.mxu0 0.0
    %152 = vmatprep.subr.mxu0 0.0
    %153 = vmatpush1.msra.mxu0 0.0
    %154 = vmatprep.subr.mxu0 0.0
    %155 = vmatpush1.msra.mxu0 0.0
    %156 = vmatprep.subr.mxu0 0.0
    %157 = vmatpush1.msra.mxu0 0.0
    %158 = vmatprep.subr.mxu0 0.0
    %159 = vmatpush1.msra.mxu0 0.0
    %160 = vmatprep.subr.mxu0 0.0
    %161 = vmatpush1.msra.mxu0 0.0
    %162 = vmatprep.subr.mxu0 0.0
    %163 = vmatpush1.msra.mxu0 0.0
    %164 = vmatprep.subr.mxu0 0.0
    %165 = vmatpush1.msra.mxu0 0.0
    %166 = vmatprep.subr.mxu0 0.0
    %167 = vmatpush1.msra.mxu0 0.0
    %168 = vmatprep.subr.mxu0 0.0
    %169 = vmatpush1.msra.mxu0 0.0
    %170 = vmatprep.subr.mxu0 0.0
    %171 = vmatpush1.msra.mxu0 0.0
    %172 = vmatprep.subr.mxu0 0.0
    %173 = vmatpush1.msra.mxu0 %v143
    %174 = vmatprep.subr.mxu0 0.0
    %175 = vmatpush1.msra.mxu0 %v142
    %176 = vmatprep.subr.mxu0 0.0
    %177 = vmatpush2.msra.mxu0 0.0
    %178 = vmatprep.subr.mxu0 0.0
    %179 = vmatpush2.msra.mxu0 0.0
    %180 = vmatprep.subr.mxu0 0.0
    %181 = vmatpush2.msra.mxu0 0.0
    %182 = vmatprep.subr.mxu0 0.0
    %183 = vmatpush2.msra.mxu0 0.0
    %184 = vmatprep.subr.mxu0 0.0
    %185 = vmatpush2.msra.mxu0 0.0
    %186 = vmatprep.subr.mxu0 0.0
    %187 = vmatpush2.msra.mxu0 0.0
    %188 = vmatprep.subr.mxu0 0.0
    %189 = vmatpush2.msra.mxu0 0.0
    %190 = vmatprep.subr.mxu0 0.0
    %191 = vmatpush2.msra.mxu0 0.0
    %192 = vmatprep.subr.mxu0 0.0
    %193 = vmatpush2.msra.mxu0 0.0
    %194 = vmatprep.subr.mxu0 0.0
    %195 = vmatpush2.msra.mxu0 0.0
    %196 = vmatprep.subr.mxu0 0.0
    %197 = vmatpush2.msra.mxu0 0.0
    %198 = vmatprep.subr.mxu0 0.0
    %199 = vmatpush2.msra.mxu0 0.0
    %200 = vmatprep.subr.mxu0 0.0
    %201 = vmatpush2.msra.mxu0 0.0
    %202 = vmatprep.subr.mxu0 0.0
    %203 = vmatpush2.msra.mxu0 0.0
    %204 = vmatprep.subr.mxu0 0.0
    %205 = vmatpush2.msra.mxu0 0.0
    %206 = vmatprep.subr.mxu0 0.0
    %207 = vmatpush2.msra.mxu0 0.0
    %208 = vmatprep.mubr.f32.mxu0 0.0
    %209 = vmatmul.mubr.f32.gmra.mxu0 %v70
    %v210 = vpop.f32.mrf.mxu0
    %v211 = vadd.f32 0.0, %v210
    %v212 = vpop.f32.mrf.mxu0
    %213 = vdwg.mxu0
    %v214 = vsub.f32 %v211, %v139
    %v215 = vmul.f32 %v214, 7.5
    %v216 = vadd.f32 %v139, %v215
    %v217 = vld [vmem:[#allocation7] sm:$0xff]
    %v218 = vmul.f32 %v216, %v217
    %vm219 = vcmask 261120
    %v220 = vsel %vm219, %v218, 0.0
    %221 = vadd.xlane.f32.xlu0 %v220
    %v222 = vpop.xlane.xlu0 %221
    %v223 = vld [vmem:[%s0] sm:$0xff]
    %vm224 = vcmask 64512
    %v226 = vsel %vm224, %v64, 0
    %228 = vmatprep.subr.mxu0 0.0
    %229 = vmatpush1.msra.mxu0 0.0
    %230 = vmatprep.subr.mxu0 0.0
    %231 = vmatpush1.msra.mxu0 0.0
    %232 = vmatprep.subr.mxu0 0.0
    %233 = vmatpush1.msra.mxu0 0.0
    %234 = vmatprep.subr.mxu0 0.0
    %235 = vmatpush1.msra.mxu0 0.0
    %236 = vmatprep.subr.mxu0 0.0
    %237 = vmatpush1.msra.mxu0 0.0
    %238 = vmatprep.subr.mxu0 0.0
    %239 = vmatpush1.msra.mxu0 0.0
    %240 = vmatprep.subr.mxu0 0.0
    %241 = vmatpush1.msra.mxu0 0.0
    %242 = vmatprep.subr.mxu0 0.0
    %243 = vmatpush1.msra.mxu0 0.0
    %244 = vmatprep.subr.mxu0 0.0
    %245 = vmatpush1.msra.mxu0 0.0
    %246 = vmatprep.subr.mxu0 0.0
    %247 = vmatpush1.msra.mxu0 0.0
    %248 = vmatprep.subr.mxu0 0.0
    %249 = vmatpush1.msra.mxu0 0.0
    %250 = vmatprep.subr.mxu0 0.0
    %251 = vmatpush1.msra.mxu0 0.0
    %252 = vmatprep.subr.mxu0 0.0
    %253 = vmatpush1.msra.mxu0 0.0
    %254 = vmatprep.subr.mxu0 0.0
    %255 = vmatpush1.msra.mxu0 0.0
    %256 = vmatprep.subr.mxu0 0.0
    %257 = vmatpush1.msra.mxu0 0.0
    %258 = vmatprep.subr.mxu0 %v63
    %259 = vmatpush1.msra.mxu0 %v62
    %260 = vmatprep.subr.mxu0 0.0
    %261 = vmatpush2.msra.mxu0 0.0
    %262 = vmatprep.subr.mxu0 0.0
    %263 = vmatpush2.msra.mxu0 0.0
    %264 = vmatprep.subr.mxu0 0.0
    %265 = vmatpush2.msra.mxu0 0.0
    %266 = vmatprep.subr.mxu0 0.0
    %267 = vmatpush2.msra.mxu0 0.0
    %268 = vmatprep.subr.mxu0 0.0
    %269 = vmatpush2.msra.mxu0 0.0
    %270 = vmatprep.subr.mxu0 0.0
    %271 = vmatpush2.msra.mxu0 0.0
    %272 = vmatprep.subr.mxu0 0.0
    %273 = vmatpush2.msra.mxu0 0.0
    %274 = vmatprep.subr.mxu0 0.0
    %275 = vmatpush2.msra.mxu0 0.0
    %276 = vmatprep.subr.mxu0 0.0
    %277 = vmatpush2.msra.mxu0 0.0
    %278 = vmatprep.subr.mxu0 0.0
    %279 = vmatpush2.msra.mxu0 0.0
    %280 = vmatprep.subr.mxu0 0.0
    %281 = vmatpush2.msra.mxu0 0.0
    %282 = vmatprep.subr.mxu0 0.0
    %283 = vmatpush2.msra.mxu0 0.0
    %284 = vmatprep.subr.mxu0 0.0
    %285 = vmatpush2.msra.mxu0 0.0
    %286 = vmatprep.subr.mxu0 0.0
    %287 = vmatpush2.msra.mxu0 0.0
    %288 = vmatprep.subr.mxu0 0.0
    %289 = vmatpush2.msra.mxu0 0.0
    %290 = vmatprep.subr.mxu0 0.0
    %291 = vmatpush2.msra.mxu0 0.0
    %292 = vmatprep.mubr.f32.mxu0 0.0
    %293 = vmatmul.mubr.f32.gmra.mxu0 %v226
    %v294 = vpop.f32.mrf.mxu0
    %v295 = vadd.f32 %v222, %v294
    %v296 = vpop.f32.mrf.mxu0
    %v297 = vadd.f32 %v222, %v296
    %298 = vdwg.mxu0
    %300 = vset.pattern.permute.xlu0 0
    %301 = vperm.xlu0 %300, %v223
    %v302 = vpop.permute.xlu0 %301
    %v304 = vmul.f32 %v302, %v295
    %v305 = vmul.f32 %v302, %v297
    %v306 = vadd.f32 %v62, %v304
    %v307 = vadd.f32 %v63, %v305
    %308 = vst [vmem:[#allocation8] sm:$0xff] %v306
    %309 = vst [vmem:[#allocation8 + $0x8] sm:$0xff] %v307
    // Predicated region
    $region42: #{tpu_custom_call.1} parent=1 // pred_check
      _
    $region43: #{tpu_custom_call.1} parent=1 // pred_check_branch
      %311 = sbr.rel (0) target = $region45
    $region44: #{tpu_custom_call.1} parent=1 // pred_region
      %s313 = ssub.s32 256, 256
      %314 = vsyncadd [#allocation4], %s313
      %s316 = sshll.u32 [#allocation8], 4
      %s317 = int_to_ptr.vmem [resolvable:$true] %s316
      %319 = dma.vmem_to_hbm [thread:$0]  %s317, 256, %s7, [#allocation4]
    $region45: #{tpu_custom_call.1} parent=1 // pred_fallthru
      _
    // Predicated region
    $region46: #{tpu_custom_call.1} parent=1 // pred_check
      _
    $region47: #{tpu_custom_call.1} parent=1 // pred_check_branch
      %321 = sbr.rel (0) target = $region49
    $region48: #{tpu_custom_call.1} parent=1 // pred_region
      %322 = dma.done [#allocation4], 256
    $region49: #{tpu_custom_call.1} parent=1 // pred_fallthru
      _
    %323 = vsyncpa [#allocation3], 1
    %324 = vsyncpa [#allocation6], 1
    %325 = vsyncpa [#allocation4], 1

</llo_original>
